<compile_context>
chip_gen: v6e
topology: v6e:2x2x1
jax: 0.10.0
libtpu: 0.0.40
codegen_flags: <defaults>
</compile_context>

<pallas_src>
import functools
import math

import jax
import jax.numpy as jnp
import numpy as np
from jax.experimental import pallas as pl
from jax.experimental.pallas import tpu as pltpu


# -----------------------------------------------------------------------------
# Kernel: one grid step = one (batch sample, output-row tile)
# -----------------------------------------------------------------------------
def _conv_fused_kernel(xc_ref, xn_ref, w_ref, b_ref, o_ref, col_ref, *,
                       K, s, cin, wq_pad, ltile):
    """
    xc_ref : (s*s*cin, ltile)  bf16  current row block, flattened (TH, wq_pad)
    xn_ref : (s*s*cin, ltile)  bf16  next row block (supplies halo rows)
    w_ref  : (Cout, K*K*cin)   bf16  weights, tap-major / cin-minor
    b_ref  : (Cout, 1)         f32
    o_ref  : (Cout, ltile)     out dtype
    col_ref: (K*K*cin, ltile)  bf16  im2col scratch
    """
    # Build the im2col patch from K*K statically shifted slices.  Each tap's
    # window is a flat shift of the (TH + halo, wq_pad) row window; the part of
    # the shift that runs past the current block comes from the start of the
    # next block.  All slice bounds are Python ints (static).
    for kh in range(K):
        for kw in range(K):
            phase = (kh % s) * s + (kw % s)          # stride-phase plane
            off = (kh // s) * wq_pad + (kw // s)     # static flat shift
            tap = kh * K + kw
            r0, r1 = tap * cin, (tap + 1) * cin
            p0, p1 = phase * cin, (phase + 1) * cin
            if off == 0:
                col_ref[r0:r1, :] = xc_ref[p0:p1, :]
            else:
                col_ref[r0:r1, 0:ltile - off] = xc_ref[p0:p1, off:ltile]
                col_ref[r0:r1, ltile - off:ltile] = xn_ref[p0:p1, 0:off]

    # Single fused MXU matmul, contraction = K*K*Cin, f32 accumulation in MXU.
    acc = jnp.dot(w_ref[...], col_ref[...], preferred_element_type=jnp.float32)
    o_ref[...] = (acc + b_ref[...]).astype(o_ref.dtype)


# -----------------------------------------------------------------------------
# Wrapper: ConvLayer.forward(x) = conv2d(reflection_pad(x))
# -----------------------------------------------------------------------------
def conv_layer_forward(x, weight, bias, *, stride=1, row_tile=32,
                       out_dtype=jnp.float32):
    """x: (B, Cin, H, W) f32; weight: (Cout, Cin, K, K); bias: (Cout,).
    Returns (B, Cout, Hout, Wout) out_dtype, matching PyTorch ConvLayer."""
    B, Cin, H, W = x.shape
    Cout, Cin2, K, K2 = weight.shape
    assert Cin2 == Cin and K2 == K and stride >= 1
    s = int(stride)

    # Pad channels to an even count so bf16 sublane-pair slicing in-kernel is
    # aligned (extra zero channels contribute nothing).
    Cin_eff = Cin + (Cin % 2)
    if Cin_eff != Cin:
        x = jnp.pad(x, ((0, 0), (0, Cin_eff - Cin), (0, 0), (0, 0)))
        weight = jnp.pad(weight, ((0, 0), (0, Cin_eff - Cin), (0, 0), (0, 0)))

    p = K // 2
    Hp, Wp = H + 2 * p, W + 2 * p
    Hout = (Hp - K) // s + 1
    Wout = (Wp - K) // s + 1
    Hq = -(-Hp // s)                       # phase-plane height
    Wq = -(-Wp // s)                       # phase-plane width
    qmax = (K - 1) // s                    # max in-phase tap offset (halo rows)
    CP = s * s * Cin_eff                   # phase-decomposed channel count
    KKC = K * K * Cin_eff                  # fused contraction length
    assert Wout + qmax <= Wq and Hout + qmax <= Hq  # no wrap into valid outputs

    out_itemsize = jnp.dtype(out_dtype).itemsize

    def tile_geom(th):
        th = max(min(th, max(Hout, 1)), qmax + 1)
        m = 128 // math.gcd(th, 128)                 # lane-dense tile length
        wq_pad = -(-Wq // m) * m
        return th, wq_pad, th * wq_pad

    def vmem_need(ltile):
        act = 2 * 2 * CP * ltile * 2                 # cur + next, double-buffered
        outb = 2 * Cout * ltile * out_itemsize       # double-buffered output
        col = KKC * ltile * 2                        # im2col scratch
        wts = 2 * (Cout * KKC * 2 + Cout * 4)        # weights + bias
        return act + outb + col + wts

    VMEM_BUDGET = 48 << 20                           # fits v7x 64 MiB / TC
    TH, Wq_pad, Ltile = tile_geom(row_tile)
    while vmem_need(Ltile) > VMEM_BUDGET and TH > qmax + 1:
        TH, Wq_pad, Ltile = tile_geom(max(TH // 2, qmax + 1))

    nT = -(-Hout // TH)
    HoutP = nT * TH
    Hrows = (nT + 1) * TH                  # one extra block so halo (t+1) exists
    assert Hrows >= Hq, (Hrows, Hq)
    assert qmax * Wq_pad + qmax <= Ltile   # every tap's flat shift fits
    assert Wq_pad >= Wq

    # --- host data movement (layout only) -------------------------------------
    xpad = jnp.pad(x, ((0, 0), (0, 0), (p, p), (p, p)), mode="reflect")
    xpad = jnp.pad(xpad, ((0, 0), (0, 0), (0, Hq * s - Hp), (0, Wq * s - Wp)))
    ph = xpad.reshape(B, Cin_eff, Hq, s, Wq, s).transpose(0, 3, 5, 1, 2, 4)
    ph = ph.reshape(B, CP, Hq, Wq)
    ph = jnp.pad(ph, ((0, 0), (0, 0), (0, Hrows - Hq), (0, Wq_pad - Wq)))
    ph = ph.astype(jnp.bfloat16).reshape(B, CP, Hrows * Wq_pad)

    # fused weight layout: (Cout, K*K*Cin_eff), tap-major / cin-minor
    w2d = weight.transpose(0, 2, 3, 1).reshape(Cout, KKC).astype(jnp.bfloat16)
    b2 = bias.reshape(Cout, 1).astype(jnp.float32)

    kernel = functools.partial(_conv_fused_kernel, K=K, s=s, cin=Cin_eff,
                               wq_pad=Wq_pad, ltile=Ltile)

    vmem_limit = int(min(max(vmem_need(Ltile) + (8 << 20), 16 << 20), 56 << 20))

    out = pl.pallas_call(
        kernel,
        out_shape=jax.ShapeDtypeStruct((B, Cout, nT * Ltile), out_dtype),
        grid_spec=pltpu.PrefetchScalarGridSpec(
            num_scalar_prefetch=0,
            grid=(B, nT),
            in_specs=[
                # current row block
                pl.BlockSpec((None, CP, Ltile), lambda b, t: (b, 0, t)),
                # next row block (halo source) -- same array, shifted index map
                pl.BlockSpec((None, CP, Ltile), lambda b, t: (b, 0, t + 1)),
                pl.BlockSpec((Cout, KKC), lambda b, t: (0, 0)),
                pl.BlockSpec((Cout, 1), lambda b, t: (0, 0)),
            ],
            out_specs=pl.BlockSpec((None, Cout, Ltile), lambda b, t: (b, 0, t)),
            scratch_shapes=[pltpu.VMEM((KKC, Ltile), jnp.bfloat16)],
        ),
        compiler_params=pltpu.CompilerParams(
            dimension_semantics=("parallel", "parallel"),
            vmem_limit_bytes=vmem_limit),
    )(ph, ph, w2d, b2)

    # crop junk rows/cols introduced by lane / row-tile padding
    out = out.reshape(B, Cout, HoutP, Wq_pad)[:, :, :Hout, :Wout]
    return out


# -----------------------------------------------------------------------------
# Pure-JAX reference (same bf16 input quantization, f32 math)
# -----------------------------------------------------------------------------
def _ref_forward(x, weight, bias, stride):
    p = weight.shape[-1] // 2
    xpad = jnp.pad(x, ((0, 0), (0, 0), (p, p), (p, p)), mode="reflect")
    xq = xpad.astype(jnp.bfloat16).astype(jnp.float32)
    wq = weight.astype(jnp.bfloat16).astype(jnp.float32)
    out = jax.lax.conv_general_dilated(
        xq, wq, (stride, stride), "VALID",
        dimension_numbers=("NCHW", "OIHW", "NCHW"),
        precision=jax.lax.Precision.HIGHEST)
    return out + bias[None, :, None, None]


# -----------------------------------------------------------------------------
if __name__ == "__main__":
    key = jax.random.PRNGKey(0)
    # small shapes consistent with transformer_net's ConvLayer instances
    configs = [
        dict(B=2, Cin=4, Cout=8, K=3, s=1, H=16, W=16),
        dict(B=2, Cin=4, Cout=8, K=3, s=2, H=16, W=16),
        dict(B=1, Cin=3, Cout=8, K=3, s=1, H=16, W=16),   # odd-Cin path
    ]
    for cfg in configs:
        kx, kw, kb, key = jax.random.split(key, 4)
        x = jax.random.normal(kx, (cfg["B"], cfg["Cin"], cfg["H"], cfg["W"]),
                              jnp.float32)
        w = 0.3 * jax.random.normal(
            kw, (cfg["Cout"], cfg["Cin"], cfg["K"], cfg["K"]), jnp.float32)
        b = 0.1 * jax.random.normal(kb, (cfg["Cout"],), jnp.float32)

        out = jax.block_until_ready(conv_layer_forward(x, w, b, stride=cfg["s"]))
        ref = jax.block_until_ready(_ref_forward(x, w, b, cfg["s"]))

        assert out.shape == ref.shape, (out.shape, ref.shape)
        np.testing.assert_allclose(np.asarray(out), np.asarray(ref),
                                   rtol=2e-3, atol=2e-3)
    print("KERNEL_OK")
</pallas_src>

<mosaic_0001>
module attributes {stable_mosaic.version = 11 : i64} {
  func.func @_conv_fused_kernel(%arg0: i32, %arg1: i32, %arg2: memref<1x4x384xbf16, #tpu.memory_space<vmem>>, %arg3: memref<1x4x384xbf16, #tpu.memory_space<vmem>>, %arg4: memref<8x36xbf16, #tpu.memory_space<vmem>>, %arg5: memref<8x1xf32, #tpu.memory_space<vmem>>, %arg6: memref<1x8x384xf32, #tpu.memory_space<vmem>>, %arg7: memref<36x384xbf16, #tpu.memory_space<vmem>>) attributes {dimension_semantics = [#tpu.dimension_semantics<parallel>, #tpu.dimension_semantics<parallel>], iteration_bounds = array<i64: 2, 1>, scalar_prefetch = 0 : i64, scratch_operands = 1 : i64, tpu.core_type = #tpu.core_type<tc>, window_params = [{transform_indices = @transform_0, window_bounds = array<i64: 1, 4, 384>}, {transform_indices = @transform_1, window_bounds = array<i64: 1, 4, 384>}, {pipeline_mode = #tpu.pipeline_mode<synchronous>, transform_indices = @transform_2, window_bounds = array<i64: 8, 36>}, {pipeline_mode = #tpu.pipeline_mode<synchronous>, transform_indices = @transform_3, window_bounds = array<i64: 8, 1>}, {transform_indices = @transform_4, window_bounds = array<i64: 1, 8, 384>}]} {
    %c0 = arith.constant 0 : index
    %c0_0 = arith.constant 0 : index
    %c0_1 = arith.constant 0 : index
    %0 = vector.load %arg2[%c0, %c0_0, %c0_1] : memref<1x4x384xbf16, #tpu.memory_space<vmem>>, vector<1x4x384xbf16>
    %1 = vector.shape_cast %0 : vector<1x4x384xbf16> to vector<4x384xbf16>
    %c0_2 = arith.constant 0 : index
    %c0_3 = arith.constant 0 : index
    %2 = vector.load %arg7[%c0_2, %c0_3] : memref<36x384xbf16, #tpu.memory_space<vmem>>, vector<4x384xbf16>
    tpu.vector_store %arg7[%c0_2, %c0_3], %1 {strides = array<i32>} : memref<36x384xbf16, #tpu.memory_space<vmem>>, vector<4x384xbf16>,
    %c0_4 = arith.constant 0 : index
    %c0_5 = arith.constant 0 : index
    %c1 = arith.constant 1 : index
    %3 = vector.load %arg2[%c0_4, %c0_5, %c1] : memref<1x4x384xbf16, #tpu.memory_space<vmem>>, vector<1x4x383xbf16>
    %4 = vector.shape_cast %3 : vector<1x4x383xbf16> to vector<4x383xbf16>
    %c4 = arith.constant 4 : index
    %c0_6 = arith.constant 0 : index
    %5 = vector.load %arg7[%c4, %c0_6] : memref<36x384xbf16, #tpu.memory_space<vmem>>, vector<4x383xbf16>
    tpu.vector_store %arg7[%c4, %c0_6], %4 {strides = array<i32>} : memref<36x384xbf16, #tpu.memory_space<vmem>>, vector<4x383xbf16>,
    %c0_7 = arith.constant 0 : index
    %c0_8 = arith.constant 0 : index
    %c0_9 = arith.constant 0 : index
    %6 = vector.load %arg3[%c0_7, %c0_8, %c0_9] : memref<1x4x384xbf16, #tpu.memory_space<vmem>>, vector<1x4x1xbf16>
    %7 = vector.shape_cast %6 : vector<1x4x1xbf16> to vector<4x1xbf16>
    %c4_10 = arith.constant 4 : index
    %c383 = arith.constant 383 : index
    %8 = vector.load %arg7[%c4_10, %c383] : memref<36x384xbf16, #tpu.memory_space<vmem>>, vector<4x1xbf16>
    tpu.vector_store %arg7[%c4_10, %c383], %7 {strides = array<i32>} : memref<36x384xbf16, #tpu.memory_space<vmem>>, vector<4x1xbf16>,
    %c0_11 = arith.constant 0 : index
    %c0_12 = arith.constant 0 : index
    %c2 = arith.constant 2 : index
    %9 = vector.load %arg2[%c0_11, %c0_12, %c2] : memref<1x4x384xbf16, #tpu.memory_space<vmem>>, vector<1x4x382xbf16>
    %10 = vector.shape_cast %9 : vector<1x4x382xbf16> to vector<4x382xbf16>
    %c8 = arith.constant 8 : index
    %c0_13 = arith.constant 0 : index
    %11 = vector.load %arg7[%c8, %c0_13] : memref<36x384xbf16, #tpu.memory_space<vmem>>, vector<4x382xbf16>
    tpu.vector_store %arg7[%c8, %c0_13], %10 {strides = array<i32>} : memref<36x384xbf16, #tpu.memory_space<vmem>>, vector<4x382xbf16>,
    %c0_14 = arith.constant 0 : index
    %c0_15 = arith.constant 0 : index
    %c0_16 = arith.constant 0 : index
    %12 = vector.load %arg3[%c0_14, %c0_15, %c0_16] : memref<1x4x384xbf16, #tpu.memory_space<vmem>>, vector<1x4x2xbf16>
    %13 = vector.shape_cast %12 : vector<1x4x2xbf16> to vector<4x2xbf16>
    %c8_17 = arith.constant 8 : index
    %c382 = arith.constant 382 : index
    %14 = vector.load %arg7[%c8_17, %c382] : memref<36x384xbf16, #tpu.memory_space<vmem>>, vector<4x2xbf16>
    tpu.vector_store %arg7[%c8_17, %c382], %13 {strides = array<i32>} : memref<36x384xbf16, #tpu.memory_space<vmem>>, vector<4x2xbf16>,
    %c0_18 = arith.constant 0 : index
    %c0_19 = arith.constant 0 : index
    %c24 = arith.constant 24 : index
    %15 = vector.load %arg2[%c0_18, %c0_19, %c24] : memref<1x4x384xbf16, #tpu.memory_space<vmem>>, vector<1x4x360xbf16>
    %16 = vector.shape_cast %15 : vector<1x4x360xbf16> to vector<4x360xbf16>
    %c12 = arith.constant 12 : index
    %c0_20 = arith.constant 0 : index
    %17 = vector.load %arg7[%c12, %c0_20] : memref<36x384xbf16, #tpu.memory_space<vmem>>, vector<4x360xbf16>
    tpu.vector_store %arg7[%c12, %c0_20], %16 {strides = array<i32>} : memref<36x384xbf16, #tpu.memory_space<vmem>>, vector<4x360xbf16>,
    %c0_21 = arith.constant 0 : index
    %c0_22 = arith.constant 0 : index
    %c0_23 = arith.constant 0 : index
    %18 = vector.load %arg3[%c0_21, %c0_22, %c0_23] : memref<1x4x384xbf16, #tpu.memory_space<vmem>>, vector<1x4x24xbf16>
    %19 = vector.shape_cast %18 : vector<1x4x24xbf16> to vector<4x24xbf16>
    %c12_24 = arith.constant 12 : index
    %c360 = arith.constant 360 : index
    %20 = vector.load %arg7[%c12_24, %c360] : memref<36x384xbf16, #tpu.memory_space<vmem>>, vector<4x24xbf16>
    tpu.vector_store %arg7[%c12_24, %c360], %19 {strides = array<i32>} : memref<36x384xbf16, #tpu.memory_space<vmem>>, vector<4x24xbf16>,
    %c0_25 = arith.constant 0 : index
    %c0_26 = arith.constant 0 : index
    %c25 = arith.constant 25 : index
    %21 = vector.load %arg2[%c0_25, %c0_26, %c25] : memref<1x4x384xbf16, #tpu.memory_space<vmem>>, vector<1x4x359xbf16>
    %22 = vector.shape_cast %21 : vector<1x4x359xbf16> to vector<4x359xbf16>
    %c16 = arith.constant 16 : index
    %c0_27 = arith.constant 0 : index
    %23 = vector.load %arg7[%c16, %c0_27] : memref<36x384xbf16, #tpu.memory_space<vmem>>, vector<4x359xbf16>
    tpu.vector_store %arg7[%c16, %c0_27], %22 {strides = array<i32>} : memref<36x384xbf16, #tpu.memory_space<vmem>>, vector<4x359xbf16>,
    %c0_28 = arith.constant 0 : index
    %c0_29 = arith.constant 0 : index
    %c0_30 = arith.constant 0 : index
    %24 = vector.load %arg3[%c0_28, %c0_29, %c0_30] : memref<1x4x384xbf16, #tpu.memory_space<vmem>>, vector<1x4x25xbf16>
    %25 = vector.shape_cast %24 : vector<1x4x25xbf16> to vector<4x25xbf16>
    %c16_31 = arith.constant 16 : index
    %c359 = arith.constant 359 : index
    %26 = vector.load %arg7[%c16_31, %c359] : memref<36x384xbf16, #tpu.memory_space<vmem>>, vector<4x25xbf16>
    tpu.vector_store %arg7[%c16_31, %c359], %25 {strides = array<i32>} : memref<36x384xbf16, #tpu.memory_space<vmem>>, vector<4x25xbf16>,
    %c0_32 = arith.constant 0 : index
    %c0_33 = arith.constant 0 : index
    %c26 = arith.constant 26 : index
    %27 = vector.load %arg2[%c0_32, %c0_33, %c26] : memref<1x4x384xbf16, #tpu.memory_space<vmem>>, vector<1x4x358xbf16>
    %28 = vector.shape_cast %27 : vector<1x4x358xbf16> to vector<4x358xbf16>
    %c20 = arith.constant 20 : index
    %c0_34 = arith.constant 0 : index
    %29 = vector.load %arg7[%c20, %c0_34] : memref<36x384xbf16, #tpu.memory_space<vmem>>, vector<4x358xbf16>
    tpu.vector_store %arg7[%c20, %c0_34], %28 {strides = array<i32>} : memref<36x384xbf16, #tpu.memory_space<vmem>>, vector<4x358xbf16>,
    %c0_35 = arith.constant 0 : index
    %c0_36 = arith.constant 0 : index
    %c0_37 = arith.constant 0 : index
    %30 = vector.load %arg3[%c0_35, %c0_36, %c0_37] : memref<1x4x384xbf16, #tpu.memory_space<vmem>>, vector<1x4x26xbf16>
    %31 = vector.shape_cast %30 : vector<1x4x26xbf16> to vector<4x26xbf16>
    %c20_38 = arith.constant 20 : index
    %c358 = arith.constant 358 : index
    %32 = vector.load %arg7[%c20_38, %c358] : memref<36x384xbf16, #tpu.memory_space<vmem>>, vector<4x26xbf16>
    tpu.vector_store %arg7[%c20_38, %c358], %31 {strides = array<i32>} : memref<36x384xbf16, #tpu.memory_space<vmem>>, vector<4x26xbf16>,
    %c0_39 = arith.constant 0 : index
    %c0_40 = arith.constant 0 : index
    %c48 = arith.constant 48 : index
    %33 = vector.load %arg2[%c0_39, %c0_40, %c48] : memref<1x4x384xbf16, #tpu.memory_space<vmem>>, vector<1x4x336xbf16>
    %34 = vector.shape_cast %33 : vector<1x4x336xbf16> to vector<4x336xbf16>
    %c24_41 = arith.constant 24 : index
    %c0_42 = arith.constant 0 : index
    %35 = vector.load %arg7[%c24_41, %c0_42] : memref<36x384xbf16, #tpu.memory_space<vmem>>, vector<4x336xbf16>
    tpu.vector_store %arg7[%c24_41, %c0_42], %34 {strides = array<i32>} : memref<36x384xbf16, #tpu.memory_space<vmem>>, vector<4x336xbf16>,
    %c0_43 = arith.constant 0 : index
    %c0_44 = arith.constant 0 : index
    %c0_45 = arith.constant 0 : index
    %36 = vector.load %arg3[%c0_43, %c0_44, %c0_45] : memref<1x4x384xbf16, #tpu.memory_space<vmem>>, vector<1x4x48xbf16>
    %37 = vector.shape_cast %36 : vector<1x4x48xbf16> to vector<4x48xbf16>
    %c24_46 = arith.constant 24 : index
    %c336 = arith.constant 336 : index
    %38 = vector.load %arg7[%c24_46, %c336] : memref<36x384xbf16, #tpu.memory_space<vmem>>, vector<4x48xbf16>
    tpu.vector_store %arg7[%c24_46, %c336], %37 {strides = array<i32>} : memref<36x384xbf16, #tpu.memory_space<vmem>>, vector<4x48xbf16>,
    %c0_47 = arith.constant 0 : index
    %c0_48 = arith.constant 0 : index
    %c49 = arith.constant 49 : index
    %39 = vector.load %arg2[%c0_47, %c0_48, %c49] : memref<1x4x384xbf16, #tpu.memory_space<vmem>>, vector<1x4x335xbf16>
    %40 = vector.shape_cast %39 : vector<1x4x335xbf16> to vector<4x335xbf16>
    %c28 = arith.constant 28 : index
    %c0_49 = arith.constant 0 : index
    %41 = vector.load %arg7[%c28, %c0_49] : memref<36x384xbf16, #tpu.memory_space<vmem>>, vector<4x335xbf16>
    tpu.vector_store %arg7[%c28, %c0_49], %40 {strides = array<i32>} : memref<36x384xbf16, #tpu.memory_space<vmem>>, vector<4x335xbf16>,
    %c0_50 = arith.constant 0 : index
    %c0_51 = arith.constant 0 : index
    %c0_52 = arith.constant 0 : index
    %42 = vector.load %arg3[%c0_50, %c0_51, %c0_52] : memref<1x4x384xbf16, #tpu.memory_space<vmem>>, vector<1x4x49xbf16>
    %43 = vector.shape_cast %42 : vector<1x4x49xbf16> to vector<4x49xbf16>
    %c28_53 = arith.constant 28 : index
    %c335 = arith.constant 335 : index
    %44 = vector.load %arg7[%c28_53, %c335] : memref<36x384xbf16, #tpu.memory_space<vmem>>, vector<4x49xbf16>
    tpu.vector_store %arg7[%c28_53, %c335], %43 {strides = array<i32>} : memref<36x384xbf16, #tpu.memory_space<vmem>>, vector<4x49xbf16>,
    %c0_54 = arith.constant 0 : index
    %c0_55 = arith.constant 0 : index
    %c50 = arith.constant 50 : index
    %45 = vector.load %arg2[%c0_54, %c0_55, %c50] : memref<1x4x384xbf16, #tpu.memory_space<vmem>>, vector<1x4x334xbf16>
    %46 = vector.shape_cast %45 : vector<1x4x334xbf16> to vector<4x334xbf16>
    %c32 = arith.constant 32 : index
    %c0_56 = arith.constant 0 : index
    %47 = vector.load %arg7[%c32, %c0_56] : memref<36x384xbf16, #tpu.memory_space<vmem>>, vector<4x334xbf16>
    tpu.vector_store %arg7[%c32, %c0_56], %46 {strides = array<i32>} : memref<36x384xbf16, #tpu.memory_space<vmem>>, vector<4x334xbf16>,
    %c0_57 = arith.constant 0 : index
    %c0_58 = arith.constant 0 : index
    %c0_59 = arith.constant 0 : index
    %48 = vector.load %arg3[%c0_57, %c0_58, %c0_59] : memref<1x4x384xbf16, #tpu.memory_space<vmem>>, vector<1x4x50xbf16>
    %49 = vector.shape_cast %48 : vector<1x4x50xbf16> to vector<4x50xbf16>
    %c32_60 = arith.constant 32 : index
    %c334 = arith.constant 334 : index
    %50 = vector.load %arg7[%c32_60, %c334] : memref<36x384xbf16, #tpu.memory_space<vmem>>, vector<4x50xbf16>
    tpu.vector_store %arg7[%c32_60, %c334], %49 {strides = array<i32>} : memref<36x384xbf16, #tpu.memory_space<vmem>>, vector<4x50xbf16>,
    %c0_61 = arith.constant 0 : index
    %c0_62 = arith.constant 0 : index
    %51 = vector.load %arg4[%c0_61, %c0_62] : memref<8x36xbf16, #tpu.memory_space<vmem>>, vector<8x36xbf16>
    %c0_63 = arith.constant 0 : index
    %c0_64 = arith.constant 0 : index
    %52 = vector.load %arg7[%c0_63, %c0_64] : memref<36x384xbf16, #tpu.memory_space<vmem>>, vector<36x384xbf16>
    %cst = arith.constant dense<0.000000e+00> : vector<8x384xf32>
    %53 = tpu.matmul %51, %52, %cst {dimension_numbers = #tpu.dot_dimension_numbers<[1], [0], [0], [1], [0, 0, 1, 1], [], []>} : vector<8x36xbf16>, vector<36x384xbf16>, vector<8x384xf32> -> vector<8x384xf32>
    %c0_65 = arith.constant 0 : index
    %c0_66 = arith.constant 0 : index
    %54 = vector.load %arg5[%c0_65, %c0_66] : memref<8x1xf32, #tpu.memory_space<vmem>>, vector<8x1xf32>
    %55 = vector.broadcast %54 : vector<8x1xf32> to vector<8x384xf32>
    %56 = arith.addf %53, %55 : vector<8x384xf32>
    %c0_67 = arith.constant 0 : index
    %c0_68 = arith.constant 0 : index
    %c0_69 = arith.constant 0 : index
    %57 = vector.load %arg6[%c0_67, %c0_68, %c0_69] : memref<1x8x384xf32, #tpu.memory_space<vmem>>, vector<1x8x384xf32>
    %58 = vector.shape_cast %57 : vector<1x8x384xf32> to vector<8x384xf32>
    %59 = vector.shape_cast %56 : vector<8x384xf32> to vector<1x8x384xf32>
    tpu.vector_store %arg6[%c0_67, %c0_68, %c0_69], %59 {strides = array<i32>} : memref<1x8x384xf32, #tpu.memory_space<vmem>>, vector<1x8x384xf32>,
    return
  }
  func.func @transform_0(%arg0: i32, %arg1: i32) -> (i32, i32, i32) {
    %c0_i32 = arith.constant 0 : i32
    %c0_i32_0 = arith.constant 0 : i32
    return %arg0, %c0_i32, %arg1 : i32, i32, i32
  }
  func.func @transform_1(%arg0: i32, %arg1: i32) -> (i32, i32, i32) {
    %c1_i32 = arith.constant 1 : i32
    %0 = arith.addi %arg1, %c1_i32 : i32
    %c0_i32 = arith.constant 0 : i32
    %c0_i32_0 = arith.constant 0 : i32
    return %arg0, %c0_i32, %0 : i32, i32, i32
  }
  func.func @transform_2(%arg0: i32, %arg1: i32) -> (i32, i32) {
    %c0_i32 = arith.constant 0 : i32
    %c0_i32_0 = arith.constant 0 : i32
    %c0_i32_1 = arith.constant 0 : i32
    return %c0_i32, %c0_i32_0 : i32, i32
  }
  func.func @transform_3(%arg0: i32, %arg1: i32) -> (i32, i32) {
    %c0_i32 = arith.constant 0 : i32
    %c0_i32_0 = arith.constant 0 : i32
    %c0_i32_1 = arith.constant 0 : i32
    return %c0_i32, %c0_i32_0 : i32, i32
  }
  func.func @transform_4(%arg0: i32, %arg1: i32) -> (i32, i32, i32) {
    %c0_i32 = arith.constant 0 : i32
    %c0_i32_0 = arith.constant 0 : i32
    return %arg0, %c0_i32, %arg1 : i32, i32, i32
  }
}

</mosaic_0001>

<llo_original>
// kernel: tpu_custom_call.1
$region0: #{tpu_custom_call.1}
  #allocation0 [shape = 'u32[]', space=smem, size = 0x4, offset = 0x4, fixed_abs, tag = 'smem constant byte address 0x4 - core index']
  #allocation1 [shape = 'u32[144,128]{1,0:T(1,128)}', space=vmem, size = 0x12000, scoped, tag = 'internal scratch']
  #allocation2 [shape = 'bf16[36,384]{1,0:T(8,128)(2,1)}', space=vmem, size = 0x7800, scoped, tag = 'scratch operand']
  %s0 = inlined_call_operand.hbm [shape: bf16[2,4,768], index: 0, kind: input, shape index: {}]
  %s1 = inlined_call_operand.hbm [shape: bf16[2,4,768], index: 1, kind: input, shape index: {}]
  %s2 = inlined_call_operand.vmem [shape: bf16[8,36], index: 2, kind: input, shape index: {}]
  %s3 = inlined_call_operand.vmem [shape: f32[8,1], index: 3, kind: input, shape index: {}]
  %s4 = inlined_call_operand.hbm [shape: f32[2,8,384], index: 4, kind: output, shape index: {}]
  %s5 = sld [smem:[#allocation0]]
  $region57: #{tpu_custom_call.1} parent=0
    _
  %s7 = ssub.s32 1, %s5
  %s8 = scalar_select 0, %s7, %s5
  $region1: #{tpu_custom_call.1} parent=0
    #allocation3 [shape = 'u8[6144]{0}', space=vmem, size = 0x1800, scoped, tag = 'input window, operand 0']
    #allocation4 [shape = 's32[2]{0}', space=sflag, size = 0x8, scoped, tag = 'scoped memory for tpu_custom_call.1']
    #allocation5 [shape = 's32[2]{0}', space=sflag, size = 0x8, scoped, tag = 'scoped memory for tpu_custom_call.1']
    #allocation6 [shape = 'u8[6144]{0}', space=vmem, size = 0x1800, scoped, tag = 'input window, operand 1']
    #allocation7 [shape = 's32[2]{0}', space=sflag, size = 0x8, scoped, tag = 'scoped memory for tpu_custom_call.1']
    #allocation8 [shape = 'u8[24576]{0}', space=vmem, size = 0x6000, scoped, tag = 'output window, operand 0']
    %9 = vsyncpa [#allocation4], 0
    %s10 = scalar_lea.sflag [#allocation4], 1
    %11 = vsyncpa %s10, 0
    %12 = vsyncpa [#allocation7], 0
    %s13 = scalar_lea.sflag [#allocation7], 1
    %14 = vsyncpa %s13, 0
    %15 = vsyncpa [#allocation5], 0
    %s16 = scalar_lea.sflag [#allocation5], 1
    %17 = vsyncpa %s16, 0
    loop: start=0, step=1, limit=4
    $region2: #{tpu_custom_call.1} parent=1 // loop_pre_header
      _
    $region3: #{tpu_custom_call.1} parent=1 // loop_header
      %s19 = sphi 0, %s23
      %p20 = scmp.ge.s32.totalorder %s19, 4
      %s26 = sphi 0, %s38
      %s27 = sphi 0, %s34
      %s28 = sphi 0, %s26
      %s29 = sphi 0, %s27
      %s30 = sphi 0, %s28
      %s31 = sphi 0, %s29
      %s43 = sphi 0, %s45
      %s46 = sphi 0, %s43
      %s47 = sphi 0, %s46
      %s63 = sphi 0, %s47
      %s73 = sphi 0, %s75
      %s76 = sphi 0, %s73
      %s77 = sphi 0, %s76
      %s93 = sphi 0, %s77
      %s97 = sphi 0, %s97
      %s99 = sphi 0, %s97
      %s100 = sphi 0, %s99
      %s114 = sphi 0, %s100
      %s118 = sphi 0, %s118
      %s120 = sphi 0, %s118
      %s121 = sphi 0, %s120
      %s135 = sphi 0, %s121
      %s143 = sphi 0, %s145
      %s146 = sphi 0, %s143
      %s147 = sphi 0, %s146
      %s163 = sphi 0, %s147
    $region4: #{tpu_custom_call.1} parent=1 // loop_header_branch
      %22 = sbr.rel (%p20) target = $region8
    $region5: #{tpu_custom_call.1} parent=1 // loop_body
      %s24 = ssub.s32 %s19, 1
      %s25 = ssub.s32 %s19, 2
      %s32 = sadd.s32 1, %s27
      %p33 = scmp.ge.s32.totalorder %s32, 1
      %s34 = scalar_select %p33, 0, %s32
      %s35 = sadd.s32 1, %s26
      %s36 = scalar_select %p33, %s35, %s26
      %p37 = scmp.ge.s32.totalorder %s36, 2
      %s38 = scalar_select %p37, 0, %s36
      %s39 = ssub.s32 %s26, %s38
      %s40 = ssub.s32 %s27, %s34
      %s41 = sor.u32 %s39, %s40
      %p42 = scmp.eq.s32.totalorder %s41, 0
      %s44 = sadd.s32 %s43, 1
      %s45 = scalar_select %p42, %s43, %s44
      %p48 = pneg %p42
      %p49 = scmp.eq.s32.totalorder %s19, 1
      %p50 = por %p48, %p49
      %p51 = scmp.ne.s32.totalorder %s43, %s46
      %p52 = scmp.eq.s32.totalorder %s19, 0
      %p53 = por %p51, %p52
      %p54 = scmp.ne.s32.totalorder %s43, %s46
      %p55 = scmp.eq.s32.totalorder %s24, 1
      %p56 = por %p54, %p55
      %p57 = scmp.ne.s32.totalorder %s46, %s47
      %p58 = scmp.eq.s32.totalorder %s24, 0
      %p59 = por %p57, %p58
      %p60 = scmp.ne.s32.totalorder %s46, %s47
      %p61 = scmp.eq.s32.totalorder %s25, 1
      %p62 = por %p60, %p61
      %p64 = scmp.ne.s32.totalorder %s47, %s63
      %p65 = scmp.eq.s32.totalorder %s25, 0
      %p66 = por %p64, %p65
      %s67 = sadd.s32 %s27, 1
      %s68 = sadd.s32 %s34, 1
      %s69 = ssub.s32 %s26, %s38
      %s70 = ssub.s32 %s67, %s68
      %s71 = sor.u32 %s69, %s70
      %p72 = scmp.eq.s32.totalorder %s71, 0
      %s74 = sadd.s32 %s73, 1
      %s75 = scalar_select %p72, %s73, %s74
      %p78 = pneg %p72
      %p79 = scmp.eq.s32.totalorder %s19, 1
      %p80 = por %p78, %p79
      %p81 = scmp.ne.s32.totalorder %s73, %s76
      %p82 = scmp.eq.s32.totalorder %s19, 0
      %p83 = por %p81, %p82
      %p84 = scmp.ne.s32.totalorder %s73, %s76
      %p85 = scmp.eq.s32.totalorder %s24, 1
      %p86 = por %p84, %p85
      %p87 = scmp.ne.s32.totalorder %s76, %s77
      %p88 = scmp.eq.s32.totalorder %s24, 0
      %p89 = por %p87, %p88
      %p90 = scmp.ne.s32.totalorder %s76, %s77
      %p91 = scmp.eq.s32.totalorder %s25, 1
      %p92 = por %p90, %p91
      %p94 = scmp.ne.s32.totalorder %s77, %s93
      %p95 = scmp.eq.s32.totalorder %s25, 0
      %p96 = por %p94, %p95
      %s98 = sadd.s32 %s97, 1
      %p101 = scmp.eq.s32.totalorder %s19, 1
      %p102 = scmp.ne.s32.totalorder %s97, %s99
      %p103 = scmp.eq.s32.totalorder %s19, 0
      %p104 = por %p102, %p103
      %p105 = scmp.ne.s32.totalorder %s97, %s99
      %p106 = scmp.eq.s32.totalorder %s24, 1
      %p107 = por %p105, %p106
      %p108 = scmp.ne.s32.totalorder %s99, %s100
      %p109 = scmp.eq.s32.totalorder %s24, 0
      %p110 = por %p108, %p109
      %p111 = scmp.ne.s32.totalorder %s99, %s100
      %p112 = scmp.eq.s32.totalorder %s25, 1
      %p113 = por %p111, %p112
      %p115 = scmp.ne.s32.totalorder %s100, %s114
      %p116 = scmp.eq.s32.totalorder %s25, 0
      %p117 = por %p115, %p116
      %s119 = sadd.s32 %s118, 1
      %p122 = scmp.eq.s32.totalorder %s19, 1
      %p123 = scmp.ne.s32.totalorder %s118, %s120
      %p124 = scmp.eq.s32.totalorder %s19, 0
      %p125 = por %p123, %p124
      %p126 = scmp.ne.s32.totalorder %s118, %s120
      %p127 = scmp.eq.s32.totalorder %s24, 1
      %p128 = por %p126, %p127
      %p129 = scmp.ne.s32.totalorder %s120, %s121
      %p130 = scmp.eq.s32.totalorder %s24, 0
      %p131 = por %p129, %p130
      %p132 = scmp.ne.s32.totalorder %s120, %s121
      %p133 = scmp.eq.s32.totalorder %s25, 1
      %p134 = por %p132, %p133
      %p136 = scmp.ne.s32.totalorder %s121, %s135
      %p137 = scmp.eq.s32.totalorder %s25, 0
      %p138 = por %p136, %p137
      %s139 = ssub.s32 %s26, %s38
      %s140 = ssub.s32 %s27, %s34
      %s141 = sor.u32 %s139, %s140
      %p142 = scmp.eq.s32.totalorder %s141, 0
      %s144 = sadd.s32 %s143, 1
      %s145 = scalar_select %p142, %s143, %s144
      %p148 = pneg %p142
      %p149 = scmp.eq.s32.totalorder %s19, 1
      %p150 = por %p148, %p149
      %p151 = scmp.ne.s32.totalorder %s143, %s146
      %p152 = scmp.eq.s32.totalorder %s19, 0
      %p153 = por %p151, %p152
      %p154 = scmp.ne.s32.totalorder %s143, %s146
      %p155 = scmp.eq.s32.totalorder %s24, 1
      %p156 = por %p154, %p155
      %p157 = scmp.ne.s32.totalorder %s146, %s147
      %p158 = scmp.eq.s32.totalorder %s24, 0
      %p159 = por %p157, %p158
      %p160 = scmp.ne.s32.totalorder %s146, %s147
      %p161 = scmp.eq.s32.totalorder %s25, 1
      %p162 = por %p160, %p161
      %p164 = scmp.ne.s32.totalorder %s147, %s163
      %p165 = scmp.eq.s32.totalorder %s25, 0
      %p166 = por %p164, %p165
      %p167 = scmp.le.s32.totalorder 1, %s19
      %p168 = scmp.lt.s32.totalorder %s19, 3
      %p169 = pnand %p167, %p168
      %p170 = pneg %p169
      // Predicated region
      $region9: #{tpu_custom_call.1} parent=5 // pred_check
        _
      $region10: #{tpu_custom_call.1} parent=5 // pred_check_branch
        %172 = sbr.rel (%p169) target = $region12
      $region11: #{tpu_custom_call.1} parent=5 // pred_region
        %s173 = ssub.s32 %s19, 1
        // Predicated region
        $region13: #{tpu_custom_call.1} parent=11 // pred_check
          %p174 = pneg %p110
        $region14: #{tpu_custom_call.1} parent=11 // pred_check_branch
          %176 = sbr.rel (%p174) target = $region16
        $region15: #{tpu_custom_call.1} parent=11 // pred_region
          _
        $region16: #{tpu_custom_call.1} parent=11 // pred_fallthru
          _
        // Predicated region
        $region17: #{tpu_custom_call.1} parent=11 // pred_check
          %p177 = pneg %p131
        $region18: #{tpu_custom_call.1} parent=11 // pred_check_branch
          %179 = sbr.rel (%p177) target = $region20
        $region19: #{tpu_custom_call.1} parent=11 // pred_region
          _
        $region20: #{tpu_custom_call.1} parent=11 // pred_fallthru
          _
      $region12: #{tpu_custom_call.1} parent=5 // pred_fallthru
        _
      %p180 = scmp.lt.s32.totalorder %s19, 2
      // Predicated region
      $region21: #{tpu_custom_call.1} parent=5 // pred_check
        %p181 = pneg %p180
      $region22: #{tpu_custom_call.1} parent=5 // pred_check_branch
        %183 = sbr.rel (%p181) target = $region24
      $region23: #{tpu_custom_call.1} parent=5 // pred_region
        // Predicated region
        $region25: #{tpu_custom_call.1} parent=23 // pred_check
          %p184 = pneg %p53
        $region26: #{tpu_custom_call.1} parent=23 // pred_check_branch
          %186 = sbr.rel (%p184) target = $region28
        $region27: #{tpu_custom_call.1} parent=23 // pred_region
          %s187 = sand.u32 %s43, 1
          %s188 = scalar_lea.sflag [#allocation4], %s187
          %s189 = sand.u32 %s43, 1
          %s190 = smul.addr %s189, 6
          %s191 = scalar_lea.vmem [#allocation3], %s190
          %s192 = smul.u32 3, %s27
          %s194 = ssub.s32 96, 96
          %195 = vsyncadd %s188, %s194
          %s196 = smul.addr %s26, 6
          %s197 = sadd.s32 %s192, %s196
          %s198 = smul.addr %s197, 32
          %s199 = scalar_lea.hbm %s0, %s198
          %s201 = sshll.u32 %s191, 4
          %s202 = int_to_ptr.vmem [resolvable:$true] %s201
          %204 = dma.hbm_to_vmem [thread:$0]  %s199, 96, %s202, %s188
        $region28: #{tpu_custom_call.1} parent=23 // pred_fallthru
          _
        // Predicated region
        $region29: #{tpu_custom_call.1} parent=23 // pred_check
          %p205 = pneg %p83
        $region30: #{tpu_custom_call.1} parent=23 // pred_check_branch
          %207 = sbr.rel (%p205) target = $region32
        $region31: #{tpu_custom_call.1} parent=23 // pred_region
          %s208 = sand.u32 %s73, 1
          %s209 = scalar_lea.sflag [#allocation7], %s208
          %s210 = sand.u32 %s73, 1
          %s211 = smul.addr %s210, 6
          %s212 = scalar_lea.vmem [#allocation6], %s211
          %s213 = sadd.s32 %s27, 1
          %s214 = smul.u32 3, %s213
          %s216 = ssub.s32 96, 96
          %217 = vsyncadd %s209, %s216
          %s218 = smul.addr %s26, 6
          %s219 = sadd.s32 %s214, %s218
          %s220 = smul.addr %s219, 32
          %s221 = scalar_lea.hbm %s1, %s220
          %s223 = sshll.u32 %s212, 4
          %s224 = int_to_ptr.vmem [resolvable:$true] %s223
          %226 = dma.hbm_to_vmem [thread:$0]  %s221, 96, %s224, %s209
        $region32: #{tpu_custom_call.1} parent=23 // pred_fallthru
          _
      $region24: #{tpu_custom_call.1} parent=5 // pred_fallthru
        _
      %p227 = scmp.le.s32.totalorder 1, %s19
      %p228 = scmp.lt.s32.totalorder %s19, 3
      %p229 = pnand %p227, %p228
      %p230 = pneg %p229
      // Predicated region
      $region33: #{tpu_custom_call.1} parent=5 // pred_check
        _
      $region34: #{tpu_custom_call.1} parent=5 // pred_check_branch
        %232 = sbr.rel (%p229) target = $region36
      $region35: #{tpu_custom_call.1} parent=5 // pred_region
        %s233 = ssub.s32 %s19, 1
        %s234 = sand.u32 %s46, 1
        %s235 = scalar_lea.sflag [#allocation4], %s234
        %s236 = sand.u32 %s46, 1
        %s237 = smul.addr %s236, 6
        %s238 = scalar_lea.vmem [#allocation3], %s237
        // Predicated region
        $region37: #{tpu_custom_call.1} parent=35 // pred_check
          %p239 = pneg %p59
        $region38: #{tpu_custom_call.1} parent=35 // pred_check_branch
          %241 = sbr.rel (%p239) target = $region40
        $region39: #{tpu_custom_call.1} parent=35 // pred_region
          %242 = dma.done %s235, 96
        $region40: #{tpu_custom_call.1} parent=35 // pred_fallthru
          _
        %s243 = sand.u32 %s76, 1
        %s244 = scalar_lea.sflag [#allocation7], %s243
        %s245 = sand.u32 %s76, 1
        %s246 = smul.addr %s245, 6
        %s247 = scalar_lea.vmem [#allocation6], %s246
        // Predicated region
        $region41: #{tpu_custom_call.1} parent=35 // pred_check
          %p248 = pneg %p89
        $region42: #{tpu_custom_call.1} parent=35 // pred_check_branch
          %250 = sbr.rel (%p248) target = $region44
        $region43: #{tpu_custom_call.1} parent=35 // pred_region
          %251 = dma.done %s244, 96
        $region44: #{tpu_custom_call.1} parent=35 // pred_fallthru
          _
        %s252 = sand.u32 %s46, 1
        %s253 = scalar_lea.sflag [#allocation4], %s252
        %s254 = sand.u32 %s46, 1
        %s255 = smul.addr %s254, 6
        %s256 = scalar_lea.vmem [#allocation3], %s255
        %p257 = pneg %p59
        %p258 = pneg %p56
        %s259 = sand.u32 %s76, 1
        %s260 = scalar_lea.sflag [#allocation7], %s259
        %s261 = sand.u32 %s76, 1
        %s262 = smul.addr %s261, 6
        %s263 = scalar_lea.vmem [#allocation6], %s262
        %p264 = pneg %p89
        %p265 = pneg %p86
        %p266 = pneg %p110
        %p267 = pneg %p107
        %p268 = pneg %p131
        %p269 = pneg %p128
        %p270 = pneg %p159
        %p271 = pneg %p156
        %s272 = sand.u32 %s146, 1
        %s273 = scalar_lea.sflag [#allocation5], %s272
        %s274 = sand.u32 %s146, 1
        %s275 = smul.addr %s274, 24
        %s276 = scalar_lea.vmem [#allocation8], %s275
        %s277 = smul.u32 3, %s29
        %s278 = sadd.s32 %s29, 1
        %s279 = smul.u32 3, %s278
        %s280 = smul.u32 3, %s29
        %v282 = vld [vmem:[%s238] sm:$0x3f]
        %v284 = vcombine.high %v282, %v282
        %v286 = vunpack.c.l.s4 1983009808
        %v287 = vunpack.c.0.s8 %v286
        %v288 = vlaneseq
        %v289 = vshrl.u32 %v288, 7
        %v290 = vsub.s32 %v287, %v289
        %v291 = vrot.slane %v282, %v290
        %v293 = vunpack.c.l.s4 1983009808
        %v294 = vunpack.c.0.s8 %v293
        %v295 = vlaneseq
        %v296 = vshrl.u32 %v295, 7
        %v297 = vsub.s32 %v294, %v296
        %v298 = vrot.slane %v284, %v297
        %301 = vst [vmem:[#allocation2] sm:$0x33] %v291
        %302 = vst [vmem:[#allocation2 + $0x8] sm:$0x3] %v298
        %v303 = vld [vmem:[%s238] sm:$0x3f]
        %v305 = vcombine.low %v303, %v303
        %v307 = vunpack.c.l.s4 1983009808
        %v308 = vunpack.c.0.s8 %v307
        %v309 = vlaneseq
        %v310 = vshrl.u32 %v309, 7
        %v311 = vsub.s32 %v308, %v310
        %v312 = vrot.slane %v305, %v311
        %v314 = vunpack.c.l.s4 1983009808
        %v315 = vunpack.c.0.s8 %v314
        %v316 = vlaneseq
        %v317 = vshrl.u32 %v316, 7
        %v318 = vsub.s32 %v315, %v317
        %v319 = vrot.slane %v303, %v318
        %320 = vrot.lane.b32.xlu0 %v312, 127
        %v321 = vpop.permute.xlu0 %320
        %322 = vrot.lane.b32.xlu0 %v319, 127
        %v323 = vpop.permute.xlu0 %322
        %v324 = vrot.slane %v321, 4
        %v325 = vrot.slane %v323, 4
        %vm326 = vcmask 1043456
        %v327 = vsel %vm326, %v324, %v325
        %vm328 = vcmask 1039360
        %v329 = vsel %vm328, %v321, %v327
        %332 = vst [vmem:[#allocation2] sm:$0xcc] %v329
        %vm333 = vcmask 1035266
        %334 = vst.msk [vmem:[#allocation2 + $0x8] sm:$0xc] %vm333, %v323
        %v335 = vld [vmem:[%s247] sm:$0x3]
        %v337 = vcombine.low %v335, %v335
        %v339 = vunpack.c.l.s4 1983009808
        %v340 = vunpack.c.0.s8 %v339
        %v341 = vlaneseq
        %v342 = vshrl.u32 %v341, 7
        %v343 = vsub.s32 %v340, %v342
        %v344 = vrot.slane %v337, %v343
        %345 = vrot.lane.b32.xlu0 %v344, 127
        %v346 = vpop.permute.xlu0 %345
        %vm348 = vcmask 1044474
        %349 = vst.msk [vmem:[#allocation2 + $0x8] sm:$0xc] %vm348, %v346
        %v350 = vld [vmem:[%s238] sm:$0x3f]
        %v352 = vcombine.high %v350, %v350
        %v354 = vunpack.c.l.s4 1983009808
        %v355 = vunpack.c.0.s8 %v354
        %v356 = vlaneseq
        %v357 = vshrl.u32 %v356, 7
        %v358 = vsub.s32 %v355, %v357
        %v359 = vrot.slane %v350, %v358
        %v361 = vunpack.c.l.s4 1983009808
        %v362 = vunpack.c.0.s8 %v361
        %v363 = vlaneseq
        %v364 = vshrl.u32 %v363, 7
        %v365 = vsub.s32 %v362, %v364
        %v366 = vrot.slane %v352, %v365
        %367 = vrot.lane.b32.xlu0 %v359, 126
        %v368 = vpop.permute.xlu0 %367
        %369 = vrot.lane.b32.xlu0 %v366, 126
        %v370 = vpop.permute.xlu0 %369
        %v371 = vrot.slane %v368, 4
        %v372 = vrot.slane %v370, 4
        %v373 = vsel %vm326, %v371, %v372
        %vm374 = vcmask 1031168
        %v375 = vsel %vm374, %v368, %v373
        %378 = vst [vmem:[#allocation2 + $0xc] sm:$0x33] %v375
        %vm379 = vcmask 1025024
        %380 = vst.msk [vmem:[#allocation2 + $0x14] sm:$0x3] %vm379, %v370
        %v381 = vld [vmem:[%s247] sm:$0x3]
        %v384 = vunpack.c.l.s4 1983009808
        %v385 = vunpack.c.0.s8 %v384
        %v386 = vlaneseq
        %v387 = vshrl.u32 %v386, 7
        %v388 = vsub.s32 %v385, %v387
        %v389 = vrot.slane %v381, %v388
        %390 = vrot.lane.b32.xlu0 %v389, 126
        %v391 = vpop.permute.xlu0 %390
        %vm393 = vcmask 1042416
        %394 = vst.msk [vmem:[#allocation2 + $0x14] sm:$0x3] %vm393, %v391
        %v395 = vld [vmem:[%s238] sm:$0x3f]
        %v397 = vcombine.low %v395, %v395
        %v399 = vunpack.c.l.s4 1983009808
        %v400 = vunpack.c.0.s8 %v399
        %v401 = vlaneseq
        %v402 = vshrl.u32 %v401, 7
        %v403 = vsub.s32 %v400, %v402
        %v404 = vrot.slane %v397, %v403
        %v406 = vunpack.c.l.s4 1983009808
        %v407 = vunpack.c.0.s8 %v406
        %v408 = vlaneseq
        %v409 = vshrl.u32 %v408, 7
        %v410 = vsub.s32 %v407, %v409
        %v411 = vrot.slane %v395, %v410
        %412 = vrot.lane.b32.xlu0 %v404, 104
        %v413 = vpop.permute.xlu0 %412
        %414 = vrot.lane.b32.xlu0 %v411, 104
        %v415 = vpop.permute.xlu0 %414
        %v416 = vrot.slane %v413, 4
        %v417 = vrot.slane %v415, 4
        %v418 = vsel %vm326, %v416, %v417
        %vm419 = vcmask 850944
        %v420 = vsel %vm419, %v413, %v418
        %423 = vst [vmem:[#allocation2 + $0xc] sm:$0xcc] %v420
        %vm424 = vcmask 846850
        %425 = vst.msk [vmem:[#allocation2 + $0x14] sm:$0xc] %vm424, %v415
        %v426 = vld [vmem:[%s247] sm:$0x3]
        %v428 = vcombine.low %v426, %v426
        %v430 = vunpack.c.l.s4 1983009808
        %v431 = vunpack.c.0.s8 %v430
        %v432 = vlaneseq
        %v433 = vshrl.u32 %v432, 7
        %v434 = vsub.s32 %v431, %v433
        %v435 = vrot.slane %v428, %v434
        %436 = vrot.lane.b32.xlu0 %v435, 104
        %v437 = vpop.permute.xlu0 %436
        %vm439 = vcmask 1044290
        %440 = vst.msk [vmem:[#allocation2 + $0x14] sm:$0xc] %vm439, %v437
        %v441 = vld [vmem:[%s238] sm:$0x3f]
        %v443 = vcombine.high %v441, %v441
        %v445 = vunpack.c.l.s4 1983009808
        %v446 = vunpack.c.0.s8 %v445
        %v447 = vlaneseq
        %v448 = vshrl.u32 %v447, 7
        %v449 = vsub.s32 %v446, %v448
        %v450 = vrot.slane %v441, %v449
        %v452 = vunpack.c.l.s4 1983009808
        %v453 = vunpack.c.0.s8 %v452
        %v454 = vlaneseq
        %v455 = vshrl.u32 %v454, 7
        %v456 = vsub.s32 %v453, %v455
        %v457 = vrot.slane %v443, %v456
        %458 = vrot.lane.b32.xlu0 %v450, 103
        %v459 = vpop.permute.xlu0 %458
        %460 = vrot.lane.b32.xlu0 %v457, 103
        %v461 = vpop.permute.xlu0 %460
        %v462 = vrot.slane %v459, 4
        %v463 = vrot.slane %v461, 4
        %v464 = vsel %vm326, %v462, %v463
        %vm465 = vcmask 842752
        %v466 = vsel %vm465, %v459, %v464
        %469 = vst [vmem:[#allocation2 + $0x18] sm:$0x33] %v466
        %vm470 = vcmask 836608
        %471 = vst.msk [vmem:[#allocation2 + $0x20] sm:$0x3] %vm470, %v461
        %v472 = vld [vmem:[%s247] sm:$0x3]
        %v475 = vunpack.c.l.s4 1983009808
        %v476 = vunpack.c.0.s8 %v475
        %v477 = vlaneseq
        %v478 = vshrl.u32 %v477, 7
        %v479 = vsub.s32 %v476, %v478
        %v480 = vrot.slane %v472, %v479
        %481 = vrot.lane.b32.xlu0 %v480, 103
        %v482 = vpop.permute.xlu0 %481
        %vm484 = vcmask 1042232
        %485 = vst.msk [vmem:[#allocation2 + $0x20] sm:$0x3] %vm484, %v482
        %v486 = vld [vmem:[%s238] sm:$0x3f]
        %v488 = vcombine.low %v486, %v486
        %v490 = vunpack.c.l.s4 1983009808
        %v491 = vunpack.c.0.s8 %v490
        %v492 = vlaneseq
        %v493 = vshrl.u32 %v492, 7
        %v494 = vsub.s32 %v491, %v493
        %v495 = vrot.slane %v488, %v494
        %v497 = vunpack.c.l.s4 1983009808
        %v498 = vunpack.c.0.s8 %v497
        %v499 = vlaneseq
        %v500 = vshrl.u32 %v499, 7
        %v501 = vsub.s32 %v498, %v500
        %v502 = vrot.slane %v486, %v501
        %503 = vrot.lane.b32.xlu0 %v495, 102
        %v504 = vpop.permute.xlu0 %503
        %505 = vrot.lane.b32.xlu0 %v502, 102
        %v506 = vpop.permute.xlu0 %505
        %v507 = vrot.slane %v504, 4
        %v508 = vrot.slane %v506, 4
        %v509 = vsel %vm326, %v507, %v508
        %vm510 = vcmask 834560
        %v511 = vsel %vm510, %v504, %v509
        %514 = vst [vmem:[#allocation2 + $0x18] sm:$0xcc] %v511
        %vm515 = vcmask 830466
        %516 = vst.msk [vmem:[#allocation2 + $0x20] sm:$0xc] %vm515, %v506
        %v517 = vld [vmem:[%s247] sm:$0x3]
        %v519 = vcombine.low %v517, %v517
        %v521 = vunpack.c.l.s4 1983009808
        %v522 = vunpack.c.0.s8 %v521
        %v523 = vlaneseq
        %v524 = vshrl.u32 %v523, 7
        %v525 = vsub.s32 %v522, %v524
        %v526 = vrot.slane %v519, %v525
        %527 = vrot.lane.b32.xlu0 %v526, 102
        %v528 = vpop.permute.xlu0 %527
        %vm530 = vcmask 1044274
        %531 = vst.msk [vmem:[#allocation2 + $0x20] sm:$0xc] %vm530, %v528
        %v532 = vld [vmem:[%s238] sm:$0x3f]
        %v534 = vcombine.high %v532, %v532
        %v536 = vunpack.c.l.s4 1983009808
        %v537 = vunpack.c.0.s8 %v536
        %v538 = vlaneseq
        %v539 = vshrl.u32 %v538, 7
        %v540 = vsub.s32 %v537, %v539
        %v541 = vrot.slane %v532, %v540
        %v543 = vunpack.c.l.s4 1983009808
        %v544 = vunpack.c.0.s8 %v543
        %v545 = vlaneseq
        %v546 = vshrl.u32 %v545, 7
        %v547 = vsub.s32 %v544, %v546
        %v548 = vrot.slane %v534, %v547
        %549 = vrot.lane.b32.xlu0 %v541, 80
        %v550 = vpop.permute.xlu0 %549
        %551 = vrot.lane.b32.xlu0 %v548, 80
        %v552 = vpop.permute.xlu0 %551
        %v553 = vrot.slane %v550, 4
        %v554 = vrot.slane %v552, 4
        %v555 = vsel %vm326, %v553, %v554
        %vm556 = vcmask 654336
        %v557 = vsel %vm556, %v550, %v555
        %560 = vst [vmem:[#allocation2 + $0x24] sm:$0x33] %v557
        %vm561 = vcmask 648192
        %562 = vst.msk [vmem:[#allocation2 + $0x2c] sm:$0x3] %vm561, %v552
        %v563 = vld [vmem:[%s247] sm:$0x3]
        %v566 = vunpack.c.l.s4 1983009808
        %v567 = vunpack.c.0.s8 %v566
        %v568 = vlaneseq
        %v569 = vshrl.u32 %v568, 7
        %v570 = vsub.s32 %v567, %v569
        %v571 = vrot.slane %v563, %v570
        %572 = vrot.lane.b32.xlu0 %v571, 80
        %v573 = vpop.permute.xlu0 %572
        %vm575 = vcmask 1042048
        %576 = vst.msk [vmem:[#allocation2 + $0x2c] sm:$0x3] %vm575, %v573
        %v577 = vld [vmem:[%s238] sm:$0x3f]
        %v579 = vcombine.low %v577, %v577
        %v581 = vunpack.c.l.s4 1983009808
        %v582 = vunpack.c.0.s8 %v581
        %v583 = vlaneseq
        %v584 = vshrl.u32 %v583, 7
        %v585 = vsub.s32 %v582, %v584
        %v586 = vrot.slane %v579, %v585
        %v588 = vunpack.c.l.s4 1983009808
        %v589 = vunpack.c.0.s8 %v588
        %v590 = vlaneseq
        %v591 = vshrl.u32 %v590, 7
        %v592 = vsub.s32 %v589, %v591
        %v593 = vrot.slane %v577, %v592
        %594 = vrot.lane.b32.xlu0 %v586, 79
        %v595 = vpop.permute.xlu0 %594
        %596 = vrot.lane.b32.xlu0 %v593, 79
        %v597 = vpop.permute.xlu0 %596
        %v598 = vrot.slane %v595, 4
        %v599 = vrot.slane %v597, 4
        %v600 = vsel %vm326, %v598, %v599
        %vm601 = vcmask 646144
        %v602 = vsel %vm601, %v595, %v600
        %605 = vst [vmem:[#allocation2 + $0x24] sm:$0xcc] %v602
        %vm606 = vcmask 642050
        %607 = vst.msk [vmem:[#allocation2 + $0x2c] sm:$0xc] %vm606, %v597
        %v608 = vld [vmem:[%s247] sm:$0x3]
        %v610 = vcombine.low %v608, %v608
        %v612 = vunpack.c.l.s4 1983009808
        %v613 = vunpack.c.0.s8 %v612
        %v614 = vlaneseq
        %v615 = vshrl.u32 %v614, 7
        %v616 = vsub.s32 %v613, %v615
        %v617 = vrot.slane %v610, %v616
        %618 = vrot.lane.b32.xlu0 %v617, 79
        %v619 = vpop.permute.xlu0 %618
        %vm621 = vcmask 1044090
        %622 = vst.msk [vmem:[#allocation2 + $0x2c] sm:$0xc] %vm621, %v619
        %v623 = vld [vmem:[%s238] sm:$0x3f]
        %v625 = vcombine.high %v623, %v623
        %v627 = vunpack.c.l.s4 1983009808
        %v628 = vunpack.c.0.s8 %v627
        %v629 = vlaneseq
        %v630 = vshrl.u32 %v629, 7
        %v631 = vsub.s32 %v628, %v630
        %v632 = vrot.slane %v623, %v631
        %v634 = vunpack.c.l.s4 1983009808
        %v635 = vunpack.c.0.s8 %v634
        %v636 = vlaneseq
        %v637 = vshrl.u32 %v636, 7
        %v638 = vsub.s32 %v635, %v637
        %v639 = vrot.slane %v625, %v638
        %640 = vrot.lane.b32.xlu0 %v632, 78
        %v641 = vpop.permute.xlu0 %640
        %642 = vrot.lane.b32.xlu0 %v639, 78
        %v643 = vpop.permute.xlu0 %642
        %v644 = vrot.slane %v641, 4
        %v645 = vrot.slane %v643, 4
        %v646 = vsel %vm326, %v644, %v645
        %vm647 = vcmask 637952
        %v648 = vsel %vm647, %v641, %v646
        %651 = vst [vmem:[#allocation2 + $0x30] sm:$0x33] %v648
        %vm652 = vcmask 631808
        %653 = vst.msk [vmem:[#allocation2 + $0x38] sm:$0x3] %vm652, %v643
        %v654 = vld [vmem:[%s247] sm:$0x3]
        %v657 = vunpack.c.l.s4 1983009808
        %v658 = vunpack.c.0.s8 %v657
        %v659 = vlaneseq
        %v660 = vshrl.u32 %v659, 7
        %v661 = vsub.s32 %v658, %v660
        %v662 = vrot.slane %v654, %v661
        %663 = vrot.lane.b32.xlu0 %v662, 78
        %v664 = vpop.permute.xlu0 %663
        %vm666 = vcmask 1042032
        %667 = vst.msk [vmem:[#allocation2 + $0x38] sm:$0x3] %vm666, %v664
        %v668 = vld [vmem:[%s2] sm:$0xf]
        %v669 = vld [vmem:[#allocation2] sm:$0xff]
        %v670 = vld [vmem:[#allocation2 + $0x8] sm:$0xf]
        %v671 = vld [vmem:[#allocation2 + $0xc] sm:$0xff]
        %v672 = vld [vmem:[#allocation2 + $0x14] sm:$0xf]
        %v673 = vld [vmem:[#allocation2 + $0x18] sm:$0xff]
        %v674 = vld [vmem:[#allocation2 + $0x20] sm:$0xf]
        %v675 = vld [vmem:[#allocation2 + $0x24] sm:$0xff]
        %v676 = vld [vmem:[#allocation2 + $0x2c] sm:$0xf]
        %v677 = vld [vmem:[#allocation2 + $0x30] sm:$0x33]
        %v678 = vld [vmem:[#allocation2 + $0x38] sm:$0x3]
        %v679 = vld [vmem:[%s3] sm:$0xff]
        %681 = vset.pattern.permute.xlu0 0
        %682 = vperm.xlu0 %681, %v679
        %v683 = vpop.permute.xlu0 %682
        %v695 = vunpack.c.l.b16 %v669
        %v696 = vunpack.c.h.b16 %v669
        %v697 = vunpack.c.l.b16 %v670
        %v698 = vunpack.c.l.b16 %v671
        %v699 = vunpack.c.h.b16 %v671
        %v700 = vunpack.c.l.b16 %v672
        %v701 = vunpack.c.l.b16 %v673
        %v702 = vunpack.c.h.b16 %v673
        %v703 = vunpack.c.l.b16 %v674
        %v704 = vunpack.c.l.b16 %v675
        %v705 = vunpack.c.h.b16 %v675
        %v706 = vunpack.c.l.b16 %v676
        %v707 = vunpack.c.l.b16 %v677
        %v708 = vunpack.c.h.b16 %v677
        %v709 = vunpack.c.l.b16 %v678
        %v710 = vpack.c.b16 %v698, %v695
        %v711 = vpack.c.b16 %v699, %v696
        %v712 = vpack.c.b16 %v700, %v697
        %v713 = vpack.c.b16 %v704, %v701
        %v714 = vpack.c.b16 %v705, %v702
        %v715 = vpack.c.b16 %v706, %v703
        %v716 = vpack.c.b16 %v707, %v707
        %v717 = vpack.c.b16 %v708, %v708
        %v718 = vpack.c.b16 %v709, %v709
        %vm725 = vcmask 293888
        %v727 = vsel %vm725, %v668, 0
        %vm729 = vcmask 1041408
        %v731 = vsel %vm729, %v716, 0
        %v734 = vsel %vm729, %v717, 0
        %v737 = vsel %vm729, %v718, 0
        %739 = vmatprep.subr.bf16.mxu0 0
        %740 = vmatpush1.bf16.msra.mxu0 0
        %741 = vmatprep.subr.bf16.mxu0 0
        %742 = vmatpush1.bf16.msra.mxu0 0
        %743 = vmatprep.subr.bf16.mxu0 0
        %744 = vmatpush1.bf16.msra.mxu0 0
        %745 = vmatprep.subr.bf16.mxu0 0
        %746 = vmatpush1.bf16.msra.mxu0 0
        %747 = vmatprep.subr.bf16.mxu0 0
        %748 = vmatpush1.bf16.msra.mxu0 0
        %749 = vmatprep.subr.bf16.mxu0 %v734
        %750 = vmatpush1.bf16.msra.mxu0 %v731
        %751 = vmatprep.subr.bf16.mxu0 %v714
        %752 = vmatpush1.bf16.msra.mxu0 %v713
        %753 = vmatprep.subr.bf16.mxu0 %v711
        %754 = vmatpush1.bf16.msra.mxu0 %v710
        %755 = vmatprep.subr.bf16.mxu0 0
        %756 = vmatpush2.bf16.msra.mxu0 0
        %757 = vmatprep.subr.bf16.mxu0 0
        %758 = vmatpush2.bf16.msra.mxu0 0
        %759 = vmatprep.subr.bf16.mxu0 0
        %760 = vmatpush2.bf16.msra.mxu0 0
        %761 = vmatprep.subr.bf16.mxu0 0
        %762 = vmatpush2.bf16.msra.mxu0 0
        %763 = vmatprep.subr.bf16.mxu0 0
        %764 = vmatpush2.bf16.msra.mxu0 0
        %765 = vmatprep.subr.bf16.mxu0 0
        %766 = vmatpush2.bf16.msra.mxu0 0
        %767 = vmatprep.subr.bf16.mxu0 0
        %768 = vmatpush2.bf16.msra.mxu0 0
        %769 = vmatprep.subr.bf16.mxu0 0
        %770 = vmatpush2.bf16.msra.mxu0 0
        %771 = vmatprep.mubr.bf16.mxu0 0
        %772 = vmatmul.mubr.bf16.gmra.mxu0 %v727
        %v773 = vpop.f32.mrf.mxu0
        %v774 = vadd.f32 %v683, %v773
        %v775 = vpop.f32.mrf.mxu0
        %v776 = vadd.f32 %v683, %v775
        %v777 = vpop.f32.mrf.mxu0
        %v778 = vpop.f32.mrf.mxu0
        %779 = vdwg.mxu0
        %780 = vmatprep.subr.bf16.mxu0 0
        %781 = vmatpush1.bf16.msra.mxu0 0
        %782 = vmatprep.subr.bf16.mxu0 0
        %783 = vmatpush1.bf16.msra.mxu0 0
        %784 = vmatprep.subr.bf16.mxu0 0
        %785 = vmatpush1.bf16.msra.mxu0 0
        %786 = vmatprep.subr.bf16.mxu0 0
        %787 = vmatpush1.bf16.msra.mxu0 0
        %788 = vmatprep.subr.bf16.mxu0 0
        %789 = vmatpush1.bf16.msra.mxu0 0
        %790 = vmatprep.subr.bf16.mxu0 0
        %791 = vmatpush1.bf16.msra.mxu0 %v737
        %792 = vmatprep.subr.bf16.mxu0 0
        %793 = vmatpush1.bf16.msra.mxu0 %v715
        %794 = vmatprep.subr.bf16.mxu0 0
        %795 = vmatpush1.bf16.msra.mxu0 %v712
        %796 = vmatprep.subr.bf16.mxu0 0
        %797 = vmatpush2.bf16.msra.mxu0 0
        %798 = vmatprep.subr.bf16.mxu0 0
        %799 = vmatpush2.bf16.msra.mxu0 0
        %800 = vmatprep.subr.bf16.mxu0 0
        %801 = vmatpush2.bf16.msra.mxu0 0
        %802 = vmatprep.subr.bf16.mxu0 0
        %803 = vmatpush2.bf16.msra.mxu0 0
        %804 = vmatprep.subr.bf16.mxu0 0
        %805 = vmatpush2.bf16.msra.mxu0 0
        %806 = vmatprep.subr.bf16.mxu0 0
        %807 = vmatpush2.bf16.msra.mxu0 0
        %808 = vmatprep.subr.bf16.mxu0 0
        %809 = vmatpush2.bf16.msra.mxu0 0
        %810 = vmatprep.subr.bf16.mxu0 0
        %811 = vmatpush2.bf16.msra.mxu0 0
        %812 = vmatprep.mubr.bf16.mxu0 0
        %813 = vmatmul.mubr.bf16.gmra.mxu0 %v727
        %v814 = vpop.f32.mrf.mxu0
        %v815 = vadd.f32 %v683, %v814
        %v816 = vpop.f32.mrf.mxu0
        %v817 = vpop.f32.mrf.mxu0
        %v818 = vpop.f32.mrf.mxu0
        %819 = vdwg.mxu0
        %820 = vst [vmem:[%s276] sm:$0xff] %v774
        %821 = vst [vmem:[%s276 + $0x8] sm:$0xff] %v776
        %822 = vst [vmem:[%s276 + $0x10] sm:$0xff] %v815
        %s823 = sand.u32 %s146, 1
        %s824 = scalar_lea.sflag [#allocation5], %s823
        %s825 = sand.u32 %s146, 1
        %s826 = smul.addr %s825, 24
        %s827 = scalar_lea.vmem [#allocation8], %s826
        // Predicated region
        $region45: #{tpu_custom_call.1} parent=35 // pred_check
          %p828 = pneg %p156
        $region46: #{tpu_custom_call.1} parent=35 // pred_check_branch
          %830 = sbr.rel (%p828) target = $region48
        $region47: #{tpu_custom_call.1} parent=35 // pred_region
          %s831 = smul.u32 3, %s29
          %s833 = ssub.s32 384, 384
          %834 = vsyncadd %s824, %s833
          %s835 = smul.addr %s28, 3
          %s836 = sadd.s32 %s831, %s835
          %s837 = smul.addr %s836, 128
          %s838 = scalar_lea.hbm %s4, %s837
          %s840 = sshll.u32 %s827, 4
          %s841 = int_to_ptr.vmem [resolvable:$true] %s840
          %843 = dma.vmem_to_hbm [thread:$0]  %s841, 384, %s838, %s824
        $region48: #{tpu_custom_call.1} parent=35 // pred_fallthru
          _
      $region36: #{tpu_custom_call.1} parent=5 // pred_fallthru
        _
      %p844 = scmp.le.s32.totalorder 2, %s19
      // Predicated region
      $region49: #{tpu_custom_call.1} parent=5 // pred_check
        %p845 = pneg %p844
      $region50: #{tpu_custom_call.1} parent=5 // pred_check_branch
        %847 = sbr.rel (%p845) target = $region52
      $region51: #{tpu_custom_call.1} parent=5 // pred_region
        %s848 = ssub.s32 %s19, 2
        // Predicated region
        $region53: #{tpu_custom_call.1} parent=51 // pred_check
          %p849 = pneg %p162
        $region54: #{tpu_custom_call.1} parent=51 // pred_check_branch
          %851 = sbr.rel (%p849) target = $region56
        $region55: #{tpu_custom_call.1} parent=51 // pred_region
          %s852 = sand.u32 %s147, 1
          %s853 = scalar_lea.sflag [#allocation5], %s852
          %s854 = sand.u32 %s147, 1
          %s855 = smul.addr %s854, 24
          %s856 = scalar_lea.vmem [#allocation8], %s855
          %857 = dma.done %s853, 384
        $region56: #{tpu_custom_call.1} parent=51 // pred_fallthru
          _
      $region52: #{tpu_custom_call.1} parent=5 // pred_fallthru
        _
    $region6: #{tpu_custom_call.1} parent=1 // loop_footer
      %s23 = sadd.s32 1, %s19
    $region7: #{tpu_custom_call.1} parent=1 // loop_footer_branch
      %18 = sbr.rel target = $region3
    $region8: #{tpu_custom_call.1} parent=1 // loop_exit
      _
    %858 = vsyncpa [#allocation4], 1
    %s859 = scalar_lea.sflag [#allocation4], 1
    %860 = vsyncpa %s859, 1
    %861 = vsyncpa [#allocation7], 1
    %s862 = scalar_lea.sflag [#allocation7], 1
    %863 = vsyncpa %s862, 1
    %864 = vsyncpa [#allocation5], 1
    %s865 = scalar_lea.sflag [#allocation5], 1
    %866 = vsyncpa %s865, 1

</llo_original>
